<compile_context>
chip_gen: v5e
topology: v5e:2x2
jax: 0.10.0
libtpu: 0.0.40
codegen_flags: <defaults>
</compile_context>

<pallas_src>
import functools

import jax
import jax.numpy as jnp
from jax.experimental import pallas as pl
from jax.experimental.pallas import tpu as pltpu


def _round_up(x, m):
    return ((x + m - 1) // m) * m


def _vit_engine_kernel(x_ref, w_ref, b_ref, o_ref):
    """Synthetic ViT engine hot path for one row tile.

    x_ref: (TILE_N, D_in)  f32   -- row tile of flattened patches (unpadded K)
    w_ref: (D_in, D_out)   bf16  -- VMEM-resident weight (same block every step)
    b_ref: (1, D_out)      f32   -- row-broadcast bias
    o_ref: (TILE_N, D_out) f32
    """
    # Cast activations to bf16 in-kernel (MXU-native operands, f32 accumulate).
    x = x_ref[...].astype(jnp.bfloat16)
    y = jnp.dot(x, w_ref[...], preferred_element_type=jnp.float32)
    y = y + b_ref[...]                       # (1, D_out) sublane-broadcast add
    # tanh-approx GELU, f32 epilogue (VALU/EUP slots are free under the DMA
    # bottleneck; f32 keeps the v5e path valid -- no bf16 VPU/EUP there).
    c = 0.7978845608028654                   # sqrt(2/pi)
    o_ref[...] = 0.5 * y * (1.0 + jnp.tanh(c * (y + 0.044715 * y * y * y)))


def _pick_tile_n(n, d_in, d_out, desired, resident_bytes, vmem_budget=48 << 20):
    """Row-tile size: big (DMA-bound kernel), multiple of 16, VMEM-safe, and
    capped so the grid has >= 2 steps (both v7x TensorCores get work)."""
    per_row = 2 * (d_in * 4 + d_out * 4)            # double-buffered x + out
    avail = max(vmem_budget - resident_bytes - (2 << 20), per_row * 16)
    vmem_cap = max(16, (avail // per_row) // 16 * 16)
    two_step_cap = _round_up(max(pl.cdiv(n, 2), 1), 16)
    tile = max(16, min(int(desired), int(vmem_cap), int(two_step_cap)))
    return int(_round_up(tile, 16))                 # bf16 sublane packing rule


@functools.partial(jax.jit, static_argnames=("tile_n",))
def _run_vit_engine(x2d, w, b, *, tile_n):
    """x2d: (N, D_in) f32 -> (N, D_out) f32 via tiled Pallas matmul+bias+GELU."""
    n, d_in = x2d.shape
    d_in_w, d_out = w.shape
    assert d_in_w == d_in

    grid = (pl.cdiv(n, tile_n),)    # ragged last block masked by Pallas

    resident = w.size * 2 + b.size * 4
    vmem_bytes = resident + 2 * (tile_n * d_in * 4 + tile_n * d_out * 4) + (2 << 20)
    vmem_limit = int(min(vmem_bytes, 64 << 20))     # never exceed v7x physical

    cost = pl.CostEstimate(
        flops=2 * n * d_in * d_out,
        transcendentals=n * d_out,
        bytes_accessed=n * d_in * 4 + resident + n * d_out * 4,
    )

    return pl.pallas_call(
        _vit_engine_kernel,
        out_shape=jax.ShapeDtypeStruct((n, d_out), jnp.float32),
        grid=grid,
        in_specs=[
            pl.BlockSpec((tile_n, d_in), lambda i: (i, 0)),   # row tile (f32)
            pl.BlockSpec((d_in, d_out), lambda i: (0, 0)),    # VMEM-resident W
            pl.BlockSpec((1, d_out), lambda i: (0, 0)),       # resident bias
        ],
        out_specs=pl.BlockSpec((tile_n, d_out), lambda i: (i, 0)),
        compiler_params=pltpu.CompilerParams(
            dimension_semantics=("parallel",),   # shard row tiles across TCs (v7x)
            vmem_limit_bytes=vmem_limit,
        ),
        cost_estimate=cost,
    )(x2d, w, b)


class VisualPallas_V2:
    """Pallas analogue of VisualTRT_V2 (synthetic engine weights, no file I/O)."""

    def __init__(self, hidden_size=32, spatial_merge_size=2, patch_dim=48,
                 tile_n=2048, seed=0):
        self.hidden_size = hidden_size
        self.spatial_merge_size = spatial_merge_size
        self.patch_dim = patch_dim
        # Enforce tile_n % 16 == 0 (bf16 sublane packing / (8,128) block rule).
        self.tile_n = max(16, _round_up(int(tile_n), 16))
        d_out = hidden_size * spatial_merge_size ** 2   # lane-dense output width
        self.d_out = d_out

        k_w, k_b = jax.random.split(jax.random.PRNGKey(seed))
        # Deterministic synthetic "engine" parameters; pre-cast W to bf16 once.
        # No K padding needed: Mosaic pads the contraction dim internally.
        w = (jax.random.normal(k_w, (patch_dim, d_out), jnp.float32)
             * (1.0 / jnp.sqrt(jnp.float32(patch_dim))))
        self.w = w.astype(jnp.bfloat16)
        self.b = jax.random.normal(k_b, (1, d_out), jnp.float32) * 0.02

    def forward(self, images, grid_thw, batch=None, use_flashattn=True):
        # --- mirrors VisualTRT_V2.forward ---
        images = images[None, ...]                      # unsqueeze(0)
        grid_thw = grid_thw[None, ...]                  # unsqueeze(0)
        images = images.astype(jnp.float32)             # .to(torch.float32)
        # torch casts grid_thw to int64; JAX x64 is off by default -> int32.
        grid_thw = grid_thw.astype(jnp.int32)
        # TODO(synk): grid_thw feeds rotary/window metadata inside the opaque
        # TRT engine; only its shape/dtype contract is reproduced here.
        assert grid_thw.ndim == 3 and grid_thw.shape[-1] == 3

        n_patches = images.shape[1]
        image_tokens = int(n_patches * self.spatial_merge_size ** 2)

        resident = self.w.size * 2 + self.b.size * 4
        tile_n = _pick_tile_n(n_patches, self.patch_dim, self.d_out,
                              desired=self.tile_n, resident_bytes=resident)

        x2d = images.reshape(n_patches, self.patch_dim)
        out2d = _run_vit_engine(x2d, self.w, self.b, tile_n=tile_n)
        visual_output = out2d.reshape(1, image_tokens, self.hidden_size)
        return visual_output[0]                                # squeeze(0)


if __name__ == "__main__":
    key = jax.random.PRNGKey(0)
    k_img, _ = jax.random.split(key)

    N_PATCHES = 300     # not a multiple of 16 -> exercises ragged last tile
    PATCH_DIM = 48      # not a multiple of 128 -> exercises in-kernel K handling
    HIDDEN = 32         # vit out_hidden_size
    MERGE = 2           # spatial_merge_size  (d_out = 32*4 = 128, lane-aligned)

    images = jax.random.normal(k_img, (N_PATCHES, PATCH_DIM), jnp.float32)
    # grid_thw: one image, (t, h, w) patch grid consistent with N_PATCHES.
    grid_thw = jnp.array([[1, 15, 20]], dtype=jnp.int32)

    model = VisualPallas_V2(hidden_size=HIDDEN,
                            spatial_merge_size=MERGE,
                            patch_dim=PATCH_DIM,
                            tile_n=2048,
                            seed=0)

    out = model.forward(images, grid_thw, batch=1)
    out = jax.block_until_ready(out)

    expected_shape = (N_PATCHES * MERGE ** 2, HIDDEN)
    assert out.shape == expected_shape, (out.shape, expected_shape)
    assert out.dtype == jnp.float32
    assert bool(jnp.all(jnp.isfinite(out)))
    print("KERNEL_OK")
</pallas_src>

<mosaic_0001>
module attributes {stable_mosaic.version = 11 : i64} {
  func.func @_vit_engine_kernel(%arg0: i32, %arg1: memref<160x48xf32, #tpu.memory_space<vmem>>, %arg2: memref<48x128xbf16, #tpu.memory_space<vmem>>, %arg3: memref<1x128xf32, #tpu.memory_space<vmem>>, %arg4: memref<160x128xf32, #tpu.memory_space<vmem>>) attributes {dimension_semantics = [#tpu.dimension_semantics<parallel>], iteration_bounds = array<i64: 2>, scalar_prefetch = 0 : i64, scratch_operands = 0 : i64, tpu.core_type = #tpu.core_type<tc>, window_params = [{transform_indices = @transform_0, window_bounds = array<i64: 160, 48>}, {pipeline_mode = #tpu.pipeline_mode<synchronous>, transform_indices = @transform_1, window_bounds = array<i64: 48, 128>}, {pipeline_mode = #tpu.pipeline_mode<synchronous>, transform_indices = @transform_2, window_bounds = array<i64: 1, 128>}, {transform_indices = @transform_3, window_bounds = array<i64: 160, 128>}]} {
    %c0 = arith.constant 0 : index
    %c0_0 = arith.constant 0 : index
    %0 = vector.load %arg1[%c0, %c0_0] : memref<160x48xf32, #tpu.memory_space<vmem>>, vector<160x48xf32>
    %1 = arith.truncf %0 : vector<160x48xf32> to vector<160x48xbf16>
    %c0_1 = arith.constant 0 : index
    %c0_2 = arith.constant 0 : index
    %2 = vector.load %arg2[%c0_1, %c0_2] : memref<48x128xbf16, #tpu.memory_space<vmem>>, vector<48x128xbf16>
    %cst = arith.constant dense<0.000000e+00> : vector<160x128xf32>
    %3 = tpu.matmul %1, %2, %cst {dimension_numbers = #tpu.dot_dimension_numbers<[1], [0], [0], [1], [0, 0, 1, 1], [], []>} : vector<160x48xbf16>, vector<48x128xbf16>, vector<160x128xf32> -> vector<160x128xf32>
    %c0_3 = arith.constant 0 : index
    %c0_4 = arith.constant 0 : index
    %4 = vector.load %arg3[%c0_3, %c0_4] : memref<1x128xf32, #tpu.memory_space<vmem>>, vector<1x128xf32>
    %5 = vector.broadcast %4 : vector<1x128xf32> to vector<160x128xf32>
    %6 = arith.addf %3, %5 : vector<160x128xf32>
    %cst_5 = arith.constant 5.000000e-01 : f32
    %7 = vector.broadcast %cst_5 : f32 to vector<160x128xf32>
    %8 = arith.mulf %7, %6 : vector<160x128xf32>
    %cst_6 = arith.constant 4.471500e-02 : f32
    %9 = vector.broadcast %cst_6 : f32 to vector<160x128xf32>
    %10 = arith.mulf %9, %6 : vector<160x128xf32>
    %11 = arith.mulf %10, %6 : vector<160x128xf32>
    %12 = arith.mulf %11, %6 : vector<160x128xf32>
    %13 = arith.addf %6, %12 : vector<160x128xf32>
    %cst_7 = arith.constant 0.797884583 : f32
    %14 = vector.broadcast %cst_7 : f32 to vector<160x128xf32>
    %15 = arith.mulf %14, %13 : vector<160x128xf32>
    %16 = math.tanh %15 : vector<160x128xf32>
    %cst_8 = arith.constant 1.000000e+00 : f32
    %17 = vector.broadcast %cst_8 : f32 to vector<160x128xf32>
    %18 = arith.addf %17, %16 : vector<160x128xf32>
    %19 = arith.mulf %8, %18 : vector<160x128xf32>
    %c0_9 = arith.constant 0 : index
    %c0_10 = arith.constant 0 : index
    %20 = vector.load %arg4[%c0_9, %c0_10] : memref<160x128xf32, #tpu.memory_space<vmem>>, vector<160x128xf32>
    tpu.vector_store %arg4[%c0_9, %c0_10], %19 {strides = array<i32>} : memref<160x128xf32, #tpu.memory_space<vmem>>, vector<160x128xf32>,
    return
  }
  func.func @transform_0(%arg0: i32) -> (i32, i32) {
    %c0_i32 = arith.constant 0 : i32
    %c0_i32_0 = arith.constant 0 : i32
    return %arg0, %c0_i32 : i32, i32
  }
  func.func @transform_1(%arg0: i32) -> (i32, i32) {
    %c0_i32 = arith.constant 0 : i32
    %c0_i32_0 = arith.constant 0 : i32
    %c0_i32_1 = arith.constant 0 : i32
    return %c0_i32, %c0_i32_0 : i32, i32
  }
  func.func @transform_2(%arg0: i32) -> (i32, i32) {
    %c0_i32 = arith.constant 0 : i32
    %c0_i32_0 = arith.constant 0 : i32
    %c0_i32_1 = arith.constant 0 : i32
    return %c0_i32, %c0_i32_0 : i32, i32
  }
  func.func @transform_3(%arg0: i32) -> (i32, i32) {
    %c0_i32 = arith.constant 0 : i32
    %c0_i32_0 = arith.constant 0 : i32
    return %arg0, %c0_i32 : i32, i32
  }
}

</mosaic_0001>

<llo_original>
// kernel: _run_vit_engine.1
$region0: #{_run_vit_engine.1}
  #allocation0 [shape = 'u32[]', space=smem, size = 0x4, offset = 0x4, fixed_abs, tag = 'smem constant byte address 0x4 - core index']
  #allocation1 [shape = 'u32[72,128]{1,0:T(1,128)}', space=vmem, size = 0x9000, scoped, tag = 'internal scratch']
  %s0 = inlined_call_operand.vmem [shape: f32[300,48], index: 0, kind: input, shape index: {}]
  %s1 = inlined_call_operand.vmem [shape: bf16[48,128], index: 1, kind: input, shape index: {}]
  %s2 = inlined_call_operand.vmem [shape: f32[1,128], index: 2, kind: input, shape index: {}]
  %s3 = inlined_call_operand.hbm [shape: f32[300,128], index: 3, kind: output, shape index: {}]
  %s4 = sld [smem:[#allocation0]]
  $region45: #{_run_vit_engine.1} parent=0
    _
  %s6 = ssub.s32 1, %s4
  %s7 = scalar_select 0, %s6, %s4
  $region1: #{_run_vit_engine.1} parent=0
    #allocation2 [shape = 'u8[163840]{0}', space=vmem, size = 0x28000, scoped, tag = 'output window, operand 0']
    #allocation3 [shape = 's32[2]{0}', space=sflag, size = 0x8, scoped, tag = 'scoped memory for _run_vit_engine.1']
    %8 = vsyncpa [#allocation3], 0
    %s9 = scalar_lea.sflag [#allocation3], 1
    %10 = vsyncpa %s9, 0
    loop: start=0, step=1, limit=4
    $region2: #{_run_vit_engine.1} parent=1 // loop_pre_header
      _
    $region3: #{_run_vit_engine.1} parent=1 // loop_header
      %s12 = sphi 0, %s16
      %p13 = scmp.ge.s32.totalorder %s12, 4
      %s22 = sphi 0, %s24
      %s25 = sphi 0, %s22
      %s26 = sphi 0, %s25
      %s42 = sphi 0, %s26
      %s46 = sphi 0, %s46
      %s48 = sphi 0, %s46
      %s49 = sphi 0, %s48
      %s63 = sphi 0, %s49
      %s67 = sphi 0, %s67
      %s69 = sphi 0, %s67
      %s70 = sphi 0, %s69
      %s84 = sphi 0, %s70
      %s90 = sphi 0, %s92
      %s93 = sphi 0, %s90
      %s94 = sphi 0, %s93
      %s110 = sphi 0, %s94
    $region4: #{_run_vit_engine.1} parent=1 // loop_header_branch
      %15 = sbr.rel (%p13) target = $region8
    $region5: #{_run_vit_engine.1} parent=1 // loop_body
      %s17 = ssub.s32 %s12, 1
      %s18 = ssub.s32 %s12, 2
      %s19 = sadd.s32 %s12, 1
      %s20 = ssub.s32 %s12, %s19
      %p21 = scmp.eq.s32.totalorder %s20, 0
      %s23 = sadd.s32 %s22, 1
      %s24 = scalar_select %p21, %s22, %s23
      %p27 = pneg %p21
      %p28 = scmp.eq.s32.totalorder %s12, 1
      %p29 = por %p27, %p28
      %p30 = scmp.ne.s32.totalorder %s22, %s25
      %p31 = scmp.eq.s32.totalorder %s12, 0
      %p32 = por %p30, %p31
      %p33 = scmp.ne.s32.totalorder %s22, %s25
      %p34 = scmp.eq.s32.totalorder %s17, 1
      %p35 = por %p33, %p34
      %p36 = scmp.ne.s32.totalorder %s25, %s26
      %p37 = scmp.eq.s32.totalorder %s17, 0
      %p38 = por %p36, %p37
      %p39 = scmp.ne.s32.totalorder %s25, %s26
      %p40 = scmp.eq.s32.totalorder %s18, 1
      %p41 = por %p39, %p40
      %p43 = scmp.ne.s32.totalorder %s26, %s42
      %p44 = scmp.eq.s32.totalorder %s18, 0
      %p45 = por %p43, %p44
      %s47 = sadd.s32 %s46, 1
      %p50 = scmp.eq.s32.totalorder %s12, 1
      %p51 = scmp.ne.s32.totalorder %s46, %s48
      %p52 = scmp.eq.s32.totalorder %s12, 0
      %p53 = por %p51, %p52
      %p54 = scmp.ne.s32.totalorder %s46, %s48
      %p55 = scmp.eq.s32.totalorder %s17, 1
      %p56 = por %p54, %p55
      %p57 = scmp.ne.s32.totalorder %s48, %s49
      %p58 = scmp.eq.s32.totalorder %s17, 0
      %p59 = por %p57, %p58
      %p60 = scmp.ne.s32.totalorder %s48, %s49
      %p61 = scmp.eq.s32.totalorder %s18, 1
      %p62 = por %p60, %p61
      %p64 = scmp.ne.s32.totalorder %s49, %s63
      %p65 = scmp.eq.s32.totalorder %s18, 0
      %p66 = por %p64, %p65
      %s68 = sadd.s32 %s67, 1
      %p71 = scmp.eq.s32.totalorder %s12, 1
      %p72 = scmp.ne.s32.totalorder %s67, %s69
      %p73 = scmp.eq.s32.totalorder %s12, 0
      %p74 = por %p72, %p73
      %p75 = scmp.ne.s32.totalorder %s67, %s69
      %p76 = scmp.eq.s32.totalorder %s17, 1
      %p77 = por %p75, %p76
      %p78 = scmp.ne.s32.totalorder %s69, %s70
      %p79 = scmp.eq.s32.totalorder %s17, 0
      %p80 = por %p78, %p79
      %p81 = scmp.ne.s32.totalorder %s69, %s70
      %p82 = scmp.eq.s32.totalorder %s18, 1
      %p83 = por %p81, %p82
      %p85 = scmp.ne.s32.totalorder %s70, %s84
      %p86 = scmp.eq.s32.totalorder %s18, 0
      %p87 = por %p85, %p86
      %s88 = ssub.s32 %s12, %s19
      %p89 = scmp.eq.s32.totalorder %s88, 0
      %s91 = sadd.s32 %s90, 1
      %s92 = scalar_select %p89, %s90, %s91
      %p95 = pneg %p89
      %p96 = scmp.eq.s32.totalorder %s12, 1
      %p97 = por %p95, %p96
      %p98 = scmp.ne.s32.totalorder %s90, %s93
      %p99 = scmp.eq.s32.totalorder %s12, 0
      %p100 = por %p98, %p99
      %p101 = scmp.ne.s32.totalorder %s90, %s93
      %p102 = scmp.eq.s32.totalorder %s17, 1
      %p103 = por %p101, %p102
      %p104 = scmp.ne.s32.totalorder %s93, %s94
      %p105 = scmp.eq.s32.totalorder %s17, 0
      %p106 = por %p104, %p105
      %p107 = scmp.ne.s32.totalorder %s93, %s94
      %p108 = scmp.eq.s32.totalorder %s18, 1
      %p109 = por %p107, %p108
      %p111 = scmp.ne.s32.totalorder %s94, %s110
      %p112 = scmp.eq.s32.totalorder %s18, 0
      %p113 = por %p111, %p112
      %p114 = scmp.le.s32.totalorder 1, %s12
      %p115 = scmp.lt.s32.totalorder %s12, 3
      %p116 = pnand %p114, %p115
      %p117 = pneg %p116
      // Predicated region
      $region9: #{_run_vit_engine.1} parent=5 // pred_check
        _
      $region10: #{_run_vit_engine.1} parent=5 // pred_check_branch
        %119 = sbr.rel (%p116) target = $region12
      $region11: #{_run_vit_engine.1} parent=5 // pred_region
        %s120 = ssub.s32 %s12, 1
        // Predicated region
        $region13: #{_run_vit_engine.1} parent=11 // pred_check
          %p121 = pneg %p59
        $region14: #{_run_vit_engine.1} parent=11 // pred_check_branch
          %123 = sbr.rel (%p121) target = $region16
        $region15: #{_run_vit_engine.1} parent=11 // pred_region
          _
        $region16: #{_run_vit_engine.1} parent=11 // pred_fallthru
          _
        // Predicated region
        $region17: #{_run_vit_engine.1} parent=11 // pred_check
          %p124 = pneg %p80
        $region18: #{_run_vit_engine.1} parent=11 // pred_check_branch
          %126 = sbr.rel (%p124) target = $region20
        $region19: #{_run_vit_engine.1} parent=11 // pred_region
          _
        $region20: #{_run_vit_engine.1} parent=11 // pred_fallthru
          _
      $region12: #{_run_vit_engine.1} parent=5 // pred_fallthru
        _
      %p127 = scmp.lt.s32.totalorder %s12, 2
      // Predicated region
      $region21: #{_run_vit_engine.1} parent=5 // pred_check
        %p128 = pneg %p127
      $region22: #{_run_vit_engine.1} parent=5 // pred_check_branch
        %130 = sbr.rel (%p128) target = $region24
      $region23: #{_run_vit_engine.1} parent=5 // pred_region
        // Predicated region
        $region25: #{_run_vit_engine.1} parent=23 // pred_check
          %p131 = pneg %p32
        $region26: #{_run_vit_engine.1} parent=23 // pred_check_branch
          %133 = sbr.rel (%p131) target = $region28
        $region27: #{_run_vit_engine.1} parent=23 // pred_region
          %s134 = smul.u32 20, %s12
          %s135 = ssub.s32 38, %s134
          %p136 = scmp.lt.s32.totalorder %s135, 20
          %s137 = scalar_select %p136, %s135, 20
          %s138 = smul.u32 8, %s137
          %p139 = scmp.lt.s32.totalorder %s134, 37
          %s140 = scalar_select %p139, %s134, 37
          %s141 = smul.addr %s140, 8
          %s142 = scalar_lea.vmem %s0, %s141
          %s143 = smul.u32 20, %s12
          %s144 = ssub.s32 38, %s143
          %p145 = scmp.lt.s32.totalorder %s144, 20
          %s146 = scalar_select %p145, %s144, 20
          %s147 = smul.u32 8, %s146
        $region28: #{_run_vit_engine.1} parent=23 // pred_fallthru
          _
      $region24: #{_run_vit_engine.1} parent=5 // pred_fallthru
        _
      %p148 = scmp.le.s32.totalorder 1, %s12
      %p149 = scmp.lt.s32.totalorder %s12, 3
      %p150 = pnand %p148, %p149
      %p151 = pneg %p150
      // Predicated region
      $region29: #{_run_vit_engine.1} parent=5 // pred_check
        _
      $region30: #{_run_vit_engine.1} parent=5 // pred_check_branch
        %153 = sbr.rel (%p150) target = $region32
      $region31: #{_run_vit_engine.1} parent=5 // pred_region
        %s154 = ssub.s32 %s12, 1
        %s155 = smul.u32 20, %s17
        %s156 = ssub.s32 38, %s155
        %p157 = scmp.lt.s32.totalorder %s156, 20
        %s158 = scalar_select %p157, %s156, 20
        %s159 = smul.u32 8, %s158
        %p160 = scmp.lt.s32.totalorder %s155, 37
        %s161 = scalar_select %p160, %s155, 37
        %s162 = smul.addr %s161, 8
        %s163 = scalar_lea.vmem %s0, %s162
        %p164 = pneg %p38
        %p165 = pneg %p35
        %p166 = pneg %p59
        %p167 = pneg %p56
        %p168 = pneg %p80
        %p169 = pneg %p77
        %p170 = pneg %p106
        %p171 = pneg %p103
        %s172 = sand.u32 %s93, 1
        %s173 = scalar_lea.sflag [#allocation3], %s172
        %s174 = sand.u32 %s93, 1
        %s175 = smul.addr %s174, 160
        %s176 = scalar_lea.vmem [#allocation2], %s175
        %s177 = smul.u32 20, %s17
        %s178 = ssub.s32 38, %s177
        %p179 = scmp.lt.s32.totalorder %s178, 20
        %s180 = scalar_select %p179, %s178, 20
        %s181 = smul.u32 8, %s180
        %p182 = scmp.lt.s32.totalorder %s177, 37
        %s183 = scalar_select %p182, %s177, 37
        %s184 = smul.addr %s183, 8
        %s185 = scalar_lea.vmem %s0, %s184
        %s186 = smul.u32 20, %s17
        %s187 = ssub.s32 38, %s186
        %p188 = scmp.lt.s32.totalorder %s187, 20
        %s189 = scalar_select %p188, %s187, 20
        %s190 = smul.u32 8, %s189
        %s191 = smul.u32 20, %s17
        %s192 = ssub.s32 38, %s191
        %p193 = scmp.lt.s32.totalorder %s192, 20
        %s194 = scalar_select %p193, %s192, 20
        %s195 = smul.u32 8, %s194
        %v197 = vld [vmem:[%s185] sm:$0xff]
        %v198 = vld [vmem:[%s185 + $0x8] sm:$0xff]
        %v199 = vld [vmem:[%s185 + $0x10] sm:$0xff]
        %v200 = vld [vmem:[%s185 + $0x18] sm:$0xff]
        %v201 = vld [vmem:[%s185 + $0x20] sm:$0xff]
        %v202 = vld [vmem:[%s185 + $0x28] sm:$0xff]
        %v203 = vld [vmem:[%s185 + $0x30] sm:$0xff]
        %v204 = vld [vmem:[%s185 + $0x38] sm:$0xff]
        %v205 = vld [vmem:[%s185 + $0x40] sm:$0xff]
        %v206 = vld [vmem:[%s185 + $0x48] sm:$0xff]
        %v207 = vld [vmem:[%s185 + $0x50] sm:$0xff]
        %v208 = vld [vmem:[%s185 + $0x58] sm:$0xff]
        %v209 = vld [vmem:[%s185 + $0x60] sm:$0xff]
        %v210 = vld [vmem:[%s185 + $0x68] sm:$0xff]
        %v211 = vld [vmem:[%s185 + $0x70] sm:$0xff]
        %v212 = vld [vmem:[%s185 + $0x78] sm:$0xff]
        %v213 = vld [vmem:[%s185 + $0x80] sm:$0xff]
        %v214 = vld [vmem:[%s185 + $0x88] sm:$0xff]
        %v215 = vld [vmem:[%s185 + $0x90] sm:$0xff]
        %v216 = vld [vmem:[%s185 + $0x98] sm:$0xff]
        %v217 = vpack.c.bf16 %v198, %v197
        %v218 = vpack.c.bf16 %v200, %v199
        %v219 = vpack.c.bf16 %v202, %v201
        %v220 = vpack.c.bf16 %v204, %v203
        %v221 = vpack.c.bf16 %v206, %v205
        %v222 = vpack.c.bf16 %v208, %v207
        %v223 = vpack.c.bf16 %v210, %v209
        %v224 = vpack.c.bf16 %v212, %v211
        %v225 = vpack.c.bf16 %v214, %v213
        %v226 = vpack.c.bf16 %v216, %v215
        %v227 = vld [vmem:[%s1] sm:$0xf]
        %v228 = vld [vmem:[%s1 + $0x4] sm:$0xf]
        %v229 = vld [vmem:[%s1 + $0x8] sm:$0xf]
        %v230 = vld [vmem:[%s1 + $0xc] sm:$0xf]
        %v231 = vld [vmem:[%s1 + $0x10] sm:$0xf]
        %v232 = vld [vmem:[%s1 + $0x14] sm:$0xf]
        %v233 = vld [vmem:[%s2] sm:$0x1]
        %v235 = vperm.slane %v233, 0
        %v243 = vunpack.c.l.b16 %v227
        %v244 = vunpack.c.l.b16 %v228
        %v245 = vunpack.c.l.b16 %v229
        %v246 = vunpack.c.l.b16 %v230
        %v247 = vunpack.c.l.b16 %v231
        %v248 = vunpack.c.l.b16 %v232
        %v249 = vpack.c.b16 %v244, %v243
        %v250 = vpack.c.b16 %v246, %v245
        %v251 = vpack.c.b16 %v248, %v247
        %vm255 = vcmask 392192
        %v257 = vsel %vm255, %v217, 0
        %v260 = vsel %vm255, %v218, 0
        %v263 = vsel %vm255, %v219, 0
        %v266 = vsel %vm255, %v220, 0
        %v269 = vsel %vm255, %v221, 0
        %v272 = vsel %vm255, %v222, 0
        %v275 = vsel %vm255, %v223, 0
        %v278 = vsel %vm255, %v224, 0
        %v281 = vsel %vm255, %v225, 0
        %v284 = vsel %vm255, %v226, 0
        %286 = vmatpush.bf16.msra.mxu0 0
        %287 = vmatpush.bf16.msra.mxu0 0
        %288 = vmatpush.bf16.msra.mxu0 0
        %289 = vmatpush.bf16.msra.mxu0 0
        %290 = vmatpush.bf16.msra.mxu0 0
        %291 = vmatpush.bf16.msra.mxu0 %v251
        %292 = vmatpush.bf16.msra.mxu0 %v250
        %293 = vmatpush.bf16.msra.mxu0 %v249
        %294 = vmatmul.bf16.gmra.mxu0 %v257
        %v295 = vpop.f32.mrf.mxu0
        %v296 = vadd.f32 %v235, %v295
        %v297 = vpop.f32.mrf.mxu0
        %v298 = vadd.f32 %v235, %v297
        %299 = vmatmul.bf16.gmra.mxu0 %v260
        %v300 = vpop.f32.mrf.mxu0
        %v301 = vadd.f32 %v235, %v300
        %v302 = vpop.f32.mrf.mxu0
        %v303 = vadd.f32 %v235, %v302
        %304 = vmatmul.bf16.gmra.mxu0 %v263
        %v305 = vpop.f32.mrf.mxu0
        %v306 = vadd.f32 %v235, %v305
        %v307 = vpop.f32.mrf.mxu0
        %v308 = vadd.f32 %v235, %v307
        %309 = vmatmul.bf16.gmra.mxu0 %v266
        %v310 = vpop.f32.mrf.mxu0
        %v311 = vadd.f32 %v235, %v310
        %v312 = vpop.f32.mrf.mxu0
        %v313 = vadd.f32 %v235, %v312
        %314 = vmatmul.bf16.gmra.mxu0 %v269
        %v315 = vpop.f32.mrf.mxu0
        %v316 = vadd.f32 %v235, %v315
        %v317 = vpop.f32.mrf.mxu0
        %v318 = vadd.f32 %v235, %v317
        %319 = vmatmul.bf16.gmra.mxu0 %v272
        %v320 = vpop.f32.mrf.mxu0
        %v321 = vadd.f32 %v235, %v320
        %v322 = vpop.f32.mrf.mxu0
        %v323 = vadd.f32 %v235, %v322
        %324 = vmatmul.bf16.gmra.mxu0 %v275
        %v325 = vpop.f32.mrf.mxu0
        %v326 = vadd.f32 %v235, %v325
        %v327 = vpop.f32.mrf.mxu0
        %v328 = vadd.f32 %v235, %v327
        %329 = vmatmul.bf16.gmra.mxu0 %v278
        %v330 = vpop.f32.mrf.mxu0
        %v331 = vadd.f32 %v235, %v330
        %v332 = vpop.f32.mrf.mxu0
        %v333 = vadd.f32 %v235, %v332
        %334 = vmatmul.bf16.gmra.mxu0 %v281
        %v335 = vpop.f32.mrf.mxu0
        %v336 = vadd.f32 %v235, %v335
        %v337 = vpop.f32.mrf.mxu0
        %v338 = vadd.f32 %v235, %v337
        %339 = vmatmul.bf16.gmra.mxu0 %v284
        %v340 = vpop.f32.mrf.mxu0
        %v341 = vadd.f32 %v235, %v340
        %v342 = vpop.f32.mrf.mxu0
        %v343 = vadd.f32 %v235, %v342
        %344 = vdwg.mxu0
        %v345 = vmul.f32 %v296, 0.5
        %v346 = vmul.f32 %v298, 0.5
        %v347 = vmul.f32 %v301, 0.5
        %v348 = vmul.f32 %v303, 0.5
        %v349 = vmul.f32 %v306, 0.5
        %v350 = vmul.f32 %v308, 0.5
        %v351 = vmul.f32 %v311, 0.5
        %v352 = vmul.f32 %v313, 0.5
        %v353 = vmul.f32 %v316, 0.5
        %v354 = vmul.f32 %v318, 0.5
        %v355 = vmul.f32 %v321, 0.5
        %v356 = vmul.f32 %v323, 0.5
        %v357 = vmul.f32 %v326, 0.5
        %v358 = vmul.f32 %v328, 0.5
        %v359 = vmul.f32 %v331, 0.5
        %v360 = vmul.f32 %v333, 0.5
        %v361 = vmul.f32 %v336, 0.5
        %v362 = vmul.f32 %v338, 0.5
        %v363 = vmul.f32 %v341, 0.5
        %v364 = vmul.f32 %v343, 0.5
        %v365 = vmul.f32 %v296, 0.044715
        %v366 = vmul.f32 %v298, 0.044715
        %v367 = vmul.f32 %v301, 0.044715
        %v368 = vmul.f32 %v303, 0.044715
        %v369 = vmul.f32 %v306, 0.044715
        %v370 = vmul.f32 %v308, 0.044715
        %v371 = vmul.f32 %v311, 0.044715
        %v372 = vmul.f32 %v313, 0.044715
        %v373 = vmul.f32 %v316, 0.044715
        %v374 = vmul.f32 %v318, 0.044715
        %v375 = vmul.f32 %v321, 0.044715
        %v376 = vmul.f32 %v323, 0.044715
        %v377 = vmul.f32 %v326, 0.044715
        %v378 = vmul.f32 %v328, 0.044715
        %v379 = vmul.f32 %v331, 0.044715
        %v380 = vmul.f32 %v333, 0.044715
        %v381 = vmul.f32 %v336, 0.044715
        %v382 = vmul.f32 %v338, 0.044715
        %v383 = vmul.f32 %v341, 0.044715
        %v384 = vmul.f32 %v343, 0.044715
        %v385 = vmul.f32 %v365, %v296
        %v386 = vmul.f32 %v366, %v298
        %v387 = vmul.f32 %v367, %v301
        %v388 = vmul.f32 %v368, %v303
        %v389 = vmul.f32 %v369, %v306
        %v390 = vmul.f32 %v370, %v308
        %v391 = vmul.f32 %v371, %v311
        %v392 = vmul.f32 %v372, %v313
        %v393 = vmul.f32 %v373, %v316
        %v394 = vmul.f32 %v374, %v318
        %v395 = vmul.f32 %v375, %v321
        %v396 = vmul.f32 %v376, %v323
        %v397 = vmul.f32 %v377, %v326
        %v398 = vmul.f32 %v378, %v328
        %v399 = vmul.f32 %v379, %v331
        %v400 = vmul.f32 %v380, %v333
        %v401 = vmul.f32 %v381, %v336
        %v402 = vmul.f32 %v382, %v338
        %v403 = vmul.f32 %v383, %v341
        %v404 = vmul.f32 %v384, %v343
        %v405 = vmul.f32 %v385, %v296
        %v406 = vmul.f32 %v386, %v298
        %v407 = vmul.f32 %v387, %v301
        %v408 = vmul.f32 %v388, %v303
        %v409 = vmul.f32 %v389, %v306
        %v410 = vmul.f32 %v390, %v308
        %v411 = vmul.f32 %v391, %v311
        %v412 = vmul.f32 %v392, %v313
        %v413 = vmul.f32 %v393, %v316
        %v414 = vmul.f32 %v394, %v318
        %v415 = vmul.f32 %v395, %v321
        %v416 = vmul.f32 %v396, %v323
        %v417 = vmul.f32 %v397, %v326
        %v418 = vmul.f32 %v398, %v328
        %v419 = vmul.f32 %v399, %v331
        %v420 = vmul.f32 %v400, %v333
        %v421 = vmul.f32 %v401, %v336
        %v422 = vmul.f32 %v402, %v338
        %v423 = vmul.f32 %v403, %v341
        %v424 = vmul.f32 %v404, %v343
        %v425 = vadd.f32 %v296, %v405
        %v426 = vadd.f32 %v298, %v406
        %v427 = vadd.f32 %v301, %v407
        %v428 = vadd.f32 %v303, %v408
        %v429 = vadd.f32 %v306, %v409
        %v430 = vadd.f32 %v308, %v410
        %v431 = vadd.f32 %v311, %v411
        %v432 = vadd.f32 %v313, %v412
        %v433 = vadd.f32 %v316, %v413
        %v434 = vadd.f32 %v318, %v414
        %v435 = vadd.f32 %v321, %v415
        %v436 = vadd.f32 %v323, %v416
        %v437 = vadd.f32 %v326, %v417
        %v438 = vadd.f32 %v328, %v418
        %v439 = vadd.f32 %v331, %v419
        %v440 = vadd.f32 %v333, %v420
        %v441 = vadd.f32 %v336, %v421
        %v442 = vadd.f32 %v338, %v422
        %v443 = vadd.f32 %v341, %v423
        %v444 = vadd.f32 %v343, %v424
        %v445 = vmul.f32 %v425, 0.7978846
        %v446 = vmul.f32 %v426, 0.7978846
        %v447 = vmul.f32 %v427, 0.7978846
        %v448 = vmul.f32 %v428, 0.7978846
        %v449 = vmul.f32 %v429, 0.7978846
        %v450 = vmul.f32 %v430, 0.7978846
        %v451 = vmul.f32 %v431, 0.7978846
        %v452 = vmul.f32 %v432, 0.7978846
        %v453 = vmul.f32 %v433, 0.7978846
        %v454 = vmul.f32 %v434, 0.7978846
        %v455 = vmul.f32 %v435, 0.7978846
        %v456 = vmul.f32 %v436, 0.7978846
        %v457 = vmul.f32 %v437, 0.7978846
        %v458 = vmul.f32 %v438, 0.7978846
        %v459 = vmul.f32 %v439, 0.7978846
        %v460 = vmul.f32 %v440, 0.7978846
        %v461 = vmul.f32 %v441, 0.7978846
        %v462 = vmul.f32 %v442, 0.7978846
        %v463 = vmul.f32 %v443, 0.7978846
        %v464 = vmul.f32 %v444, 0.7978846
        %v465 = vtanh.pop %v445
        %v466 = vtanh.pop %v446
        %v467 = vtanh.pop %v447
        %v468 = vtanh.pop %v448
        %v469 = vtanh.pop %v449
        %v470 = vtanh.pop %v450
        %v471 = vtanh.pop %v451
        %v472 = vtanh.pop %v452
        %v473 = vtanh.pop %v453
        %v474 = vtanh.pop %v454
        %v475 = vtanh.pop %v455
        %v476 = vtanh.pop %v456
        %v477 = vtanh.pop %v457
        %v478 = vtanh.pop %v458
        %v479 = vtanh.pop %v459
        %v480 = vtanh.pop %v460
        %v481 = vtanh.pop %v461
        %v482 = vtanh.pop %v462
        %v483 = vtanh.pop %v463
        %v484 = vtanh.pop %v464
        %v485 = vadd.f32 %v465, 1.0
        %v486 = vadd.f32 %v466, 1.0
        %v487 = vadd.f32 %v467, 1.0
        %v488 = vadd.f32 %v468, 1.0
        %v489 = vadd.f32 %v469, 1.0
        %v490 = vadd.f32 %v470, 1.0
        %v491 = vadd.f32 %v471, 1.0
        %v492 = vadd.f32 %v472, 1.0
        %v493 = vadd.f32 %v473, 1.0
        %v494 = vadd.f32 %v474, 1.0
        %v495 = vadd.f32 %v475, 1.0
        %v496 = vadd.f32 %v476, 1.0
        %v497 = vadd.f32 %v477, 1.0
        %v498 = vadd.f32 %v478, 1.0
        %v499 = vadd.f32 %v479, 1.0
        %v500 = vadd.f32 %v480, 1.0
        %v501 = vadd.f32 %v481, 1.0
        %v502 = vadd.f32 %v482, 1.0
        %v503 = vadd.f32 %v483, 1.0
        %v504 = vadd.f32 %v484, 1.0
        %v505 = vmul.f32 %v345, %v485
        %v506 = vmul.f32 %v346, %v486
        %v507 = vmul.f32 %v347, %v487
        %v508 = vmul.f32 %v348, %v488
        %v509 = vmul.f32 %v349, %v489
        %v510 = vmul.f32 %v350, %v490
        %v511 = vmul.f32 %v351, %v491
        %v512 = vmul.f32 %v352, %v492
        %v513 = vmul.f32 %v353, %v493
        %v514 = vmul.f32 %v354, %v494
        %v515 = vmul.f32 %v355, %v495
        %v516 = vmul.f32 %v356, %v496
        %v517 = vmul.f32 %v357, %v497
        %v518 = vmul.f32 %v358, %v498
        %v519 = vmul.f32 %v359, %v499
        %v520 = vmul.f32 %v360, %v500
        %v521 = vmul.f32 %v361, %v501
        %v522 = vmul.f32 %v362, %v502
        %v523 = vmul.f32 %v363, %v503
        %v524 = vmul.f32 %v364, %v504
        %525 = vst [vmem:[%s176] sm:$0xff] %v505
        %526 = vst [vmem:[%s176 + $0x8] sm:$0xff] %v506
        %527 = vst [vmem:[%s176 + $0x10] sm:$0xff] %v507
        %528 = vst [vmem:[%s176 + $0x18] sm:$0xff] %v508
        %529 = vst [vmem:[%s176 + $0x20] sm:$0xff] %v509
        %530 = vst [vmem:[%s176 + $0x28] sm:$0xff] %v510
        %531 = vst [vmem:[%s176 + $0x30] sm:$0xff] %v511
        %532 = vst [vmem:[%s176 + $0x38] sm:$0xff] %v512
        %533 = vst [vmem:[%s176 + $0x40] sm:$0xff] %v513
        %534 = vst [vmem:[%s176 + $0x48] sm:$0xff] %v514
        %535 = vst [vmem:[%s176 + $0x50] sm:$0xff] %v515
        %536 = vst [vmem:[%s176 + $0x58] sm:$0xff] %v516
        %537 = vst [vmem:[%s176 + $0x60] sm:$0xff] %v517
        %538 = vst [vmem:[%s176 + $0x68] sm:$0xff] %v518
        %539 = vst [vmem:[%s176 + $0x70] sm:$0xff] %v519
        %540 = vst [vmem:[%s176 + $0x78] sm:$0xff] %v520
        %541 = vst [vmem:[%s176 + $0x80] sm:$0xff] %v521
        %542 = vst [vmem:[%s176 + $0x88] sm:$0xff] %v522
        %543 = vst [vmem:[%s176 + $0x90] sm:$0xff] %v523
        %544 = vst [vmem:[%s176 + $0x98] sm:$0xff] %v524
        %s545 = sand.u32 %s93, 1
        %s546 = scalar_lea.sflag [#allocation3], %s545
        %s547 = sand.u32 %s93, 1
        %s548 = smul.addr %s547, 160
        %s549 = scalar_lea.vmem [#allocation2], %s548
        // Predicated region
        $region33: #{_run_vit_engine.1} parent=31 // pred_check
          %p550 = pneg %p103
        $region34: #{_run_vit_engine.1} parent=31 // pred_check_branch
          %552 = sbr.rel (%p550) target = $region36
        $region35: #{_run_vit_engine.1} parent=31 // pred_region
          %s553 = smul.u32 20, %s17
          %s554 = ssub.s32 38, %s553
          %p555 = scmp.lt.s32.totalorder %s554, 20
          %s556 = scalar_select %p555, %s554, 20
          %s557 = smul.u32 8, %s556
          %s558 = ssub.s32 160, %s557
          %s559 = sshll.u32 %s558, 4
          %560 = vsyncadd %s546, %s559
          %p561 = scmp.ne.s32.totalorder 0, %s557
          %s562 = smul.addr %s553, 8
          %s563 = scalar_lea.hbm %s3, %s562
          %s564 = smul.u32 8, %s556
          %s565 = sshll.u32 %s549, 4
          %s566 = int_to_ptr.vmem [resolvable:$true] %s565
          %s567 = sshll.u32 %s563, 4
          %s568 = int_to_ptr.hbm [resolvable:$true] %s567
          %s569 = sshll.u32 %s564, 4
          %573 = dma.vmem_to_hbm [thread:$0]  (%p561), %s566, %s569, %s568, %s546, 128, 128, 8
        $region36: #{_run_vit_engine.1} parent=31 // pred_fallthru
          _
      $region32: #{_run_vit_engine.1} parent=5 // pred_fallthru
        _
      %p574 = scmp.le.s32.totalorder 2, %s12
      // Predicated region
      $region37: #{_run_vit_engine.1} parent=5 // pred_check
        %p575 = pneg %p574
      $region38: #{_run_vit_engine.1} parent=5 // pred_check_branch
        %577 = sbr.rel (%p575) target = $region40
      $region39: #{_run_vit_engine.1} parent=5 // pred_region
        %s578 = ssub.s32 %s12, 2
        // Predicated region
        $region41: #{_run_vit_engine.1} parent=39 // pred_check
          %p579 = pneg %p109
        $region42: #{_run_vit_engine.1} parent=39 // pred_check_branch
          %581 = sbr.rel (%p579) target = $region44
        $region43: #{_run_vit_engine.1} parent=39 // pred_region
          %s582 = sand.u32 %s94, 1
          %s583 = scalar_lea.sflag [#allocation3], %s582
          %s584 = sand.u32 %s94, 1
          %s585 = smul.addr %s584, 160
          %s586 = scalar_lea.vmem [#allocation2], %s585
          %588 = dma.done %s583, 2560
        $region44: #{_run_vit_engine.1} parent=39 // pred_fallthru
          _
      $region40: #{_run_vit_engine.1} parent=5 // pred_fallthru
        _
    $region6: #{_run_vit_engine.1} parent=1 // loop_footer
      %s16 = sadd.s32 1, %s12
    $region7: #{_run_vit_engine.1} parent=1 // loop_footer_branch
      %11 = sbr.rel target = $region3
    $region8: #{_run_vit_engine.1} parent=1 // loop_exit
      _
    %589 = vsyncpa [#allocation3], 1
    %s590 = scalar_lea.sflag [#allocation3], 1
    %591 = vsyncpa %s590, 1

</llo_original>
